<compile_context>
chip_gen: v7x
topology: tpu7x:2x2x1
jax: 0.10.0
libtpu: 0.0.40
codegen_flags: <defaults>
</compile_context>

<pallas_src>
import functools

import jax
import jax.numpy as jnp
from jax.experimental import pallas as pl
from jax.experimental.pallas import tpu as pltpu


def _attn_pool_kernel(x_ref, w_ref, o_ref):
    # x_ref: (Bt, T, D) input tile          (VMEM, native dtype)
    # w_ref: (1, D)     Linear weight row   (VMEM, PyTorch lane-dense layout)
    # o_ref: (Bt, D)    pooled output tile
    x = x_ref[...]                                   # native dtype; casts fuse per-op
    w = w_ref[...].astype(jnp.float32)               # (1, D) -> broadcasts over (Bt, T, D)

    # logits[b, t] = <x[b, t, :], w>   (VPU multiply + XLU lane reduce).
    # nn.Linear bias omitted: softmax over T is invariant to a shared scalar shift.
    logits = jnp.sum(x * w, axis=-1)                 # (Bt, T) f32

    # Numerically stable softmax over the sequence axis.
    m = jnp.max(logits, axis=-1, keepdims=True)      # (Bt, 1)
    e = jnp.exp(logits - m)                          # (Bt, T)
    denom = jnp.sum(e, axis=-1, keepdims=True)       # (Bt, 1)

    # Unnormalized weighted sum over T (sublane axis) on VPU/XLU; f32 accumulate
    # via promotion with e — no persistent f32 tile copy, no M=1 MXU matmuls.
    pooled = jnp.sum(x * e[:, :, None], axis=1)      # (Bt, D) f32

    inv = pl.reciprocal(denom, approx=True)          # EUP slot, effectively free
    o_ref[...] = (pooled * inv).astype(o_ref.dtype)  # (Bt, D)


_TILE_TARGET_BYTES = 8 * 1024 * 1024   # ~8 MiB input tiles amortize the ~0.35 us/step overhead
_VMEM_LIMIT_BYTES = 48 * 1024 * 1024   # 2x input bufs + f32 temps + output; < v7x 64 MiB VMEM


@functools.partial(jax.jit, static_argnames=("block_b",))
def self_attention_pooling(batch, weight, bias=None, *, block_b=None):
    """batch: (B, T, D); weight: (1, D) (nn.Linear layout); bias is accepted for
    API fidelity but mathematically redundant (softmax shift invariance).
    Returns (B, D)."""
    del bias
    B, T, D = batch.shape
    assert weight.shape == (1, D), weight.shape
    # NOTE: for unmasked (lane-dense) stores D should ideally be a multiple of
    # 128; we do not pad here because that would re-read/write the whole
    # memory-bound input in HBM.

    itemsize = jnp.dtype(batch.dtype).itemsize
    if block_b is None:
        block_b = max(1, _TILE_TARGET_BYTES // max(1, T * D * itemsize))
    if block_b >= B:
        if B > 8:
            # Keep >= 2 grid steps so both v7x TensorCores (and DMA queues)
            # get work; keep blocks sublane-aligned (multiple of 8).
            block_b = max(8, (pl.cdiv(B, 2) // 8) * 8)
        else:
            block_b = B
    else:
        block_b = min(B, max(8, (block_b // 8) * 8))
    num_blocks = pl.cdiv(B, block_b)
    # No jnp.pad: the partial last block is masked on writeback by Pallas;
    # rows are independent so garbage in out-of-bounds rows never reaches HBM.

    return pl.pallas_call(
        _attn_pool_kernel,
        out_shape=jax.ShapeDtypeStruct((B, D), batch.dtype),
        grid_spec=pltpu.PrefetchScalarGridSpec(
            num_scalar_prefetch=0,
            grid=(num_blocks,),
            in_specs=[
                pl.BlockSpec((block_b, T, D), lambda i: (i, 0, 0)),   # batch tile
                pl.BlockSpec((1, D), lambda i: (0, 0)),               # shared weight
            ],
            out_specs=pl.BlockSpec((block_b, D), lambda i: (i, 0)),
        ),
        compiler_params=pltpu.CompilerParams(
            dimension_semantics=("parallel",),
            vmem_limit_bytes=_VMEM_LIMIT_BYTES,
        ),
    )(batch, weight)


def reference(batch, weight, bias):
    logits = jnp.einsum("btd,od->bto", batch, weight)[..., 0] + bias[0]   # (B, T)
    attn = jax.nn.softmax(logits, axis=-1)[..., None]                     # (B, T, 1)
    return jnp.sum(batch * attn, axis=1)                                  # (B, D)


if __name__ == "__main__":
    key = jax.random.PRNGKey(0)
    kx, kw, kb, kx2 = jax.random.split(key, 4)

    B, T, D = 2, 8, 32
    x = jax.random.normal(kx, (B, T, D), dtype=jnp.float32)
    # deterministic "Linear(D, 1)" parameters (uniform, like PyTorch default init)
    bound = 1.0 / (D ** 0.5)
    w = jax.random.uniform(kw, (1, D), minval=-bound, maxval=bound,
                           dtype=jnp.float32)
    b = jax.random.uniform(kb, (1,), minval=-bound, maxval=bound,
                           dtype=jnp.float32)

    out = jax.block_until_ready(self_attention_pooling(x, w, b))
    ref = reference(x, w, b)
    assert out.shape == (B, D), out.shape
    # approx reciprocal introduces ~1e-4 relative error -> slightly looser tol
    assert jnp.allclose(out, ref, atol=2e-3, rtol=2e-3), \
        float(jnp.max(jnp.abs(out - ref)))

    # Non-divisible batch path: partial last block (no jnp.pad copy), grid = 3.
    B2 = 20
    x2 = jax.random.normal(kx2, (B2, T, D), dtype=jnp.float32)
    out2 = jax.block_until_ready(self_attention_pooling(x2, w, b, block_b=8))
    ref2 = reference(x2, w, b)
    assert out2.shape == (B2, D), out2.shape
    assert jnp.allclose(out2, ref2, atol=2e-3, rtol=2e-3), \
        float(jnp.max(jnp.abs(out2 - ref2)))

    print("KERNEL_OK")
</pallas_src>

<mosaic_0001>
module attributes {stable_mosaic.version = 11 : i64} {
  func.func @_attn_pool_kernel(%arg0: i32, %arg1: memref<2x8x32xf32, #tpu.memory_space<vmem>>, %arg2: memref<1x32xf32, #tpu.memory_space<vmem>>, %arg3: memref<2x32xf32, #tpu.memory_space<vmem>>) attributes {dimension_semantics = [#tpu.dimension_semantics<parallel>], iteration_bounds = array<i64: 1>, scalar_prefetch = 0 : i64, scratch_operands = 0 : i64, tpu.core_type = #tpu.core_type<tc>, window_params = [{transform_indices = @transform_0, window_bounds = array<i64: 2, 8, 32>}, {pipeline_mode = #tpu.pipeline_mode<synchronous>, transform_indices = @transform_1, window_bounds = array<i64: 1, 32>}, {transform_indices = @transform_2, window_bounds = array<i64: 2, 32>}]} {
    %c0 = arith.constant 0 : index
    %c0_0 = arith.constant 0 : index
    %c0_1 = arith.constant 0 : index
    %0 = vector.load %arg1[%c0, %c0_0, %c0_1] : memref<2x8x32xf32, #tpu.memory_space<vmem>>, vector<2x8x32xf32>
    %c0_2 = arith.constant 0 : index
    %c0_3 = arith.constant 0 : index
    %1 = vector.load %arg2[%c0_2, %c0_3] : memref<1x32xf32, #tpu.memory_space<vmem>>, vector<1x32xf32>
    %2 = vector.shape_cast %1 : vector<1x32xf32> to vector<1x1x32xf32>
    %3 = vector.broadcast %2 : vector<1x1x32xf32> to vector<2x8x32xf32>
    %4 = arith.mulf %0, %3 : vector<2x8x32xf32>
    %cst = arith.constant dense<0.000000e+00> : vector<2x8xf32>
    %5 = vector.multi_reduction <add>, %4, %cst [2] : vector<2x8x32xf32> to vector<2x8xf32>
    %cst_4 = arith.constant dense<0xFF800000> : vector<2xf32>
    %6 = vector.multi_reduction <maximumf>, %5, %cst_4 [1] : vector<2x8xf32> to vector<2xf32>
    %7 = vector.shape_cast %6 : vector<2xf32> to vector<2x1xf32>
    %8 = vector.broadcast %7 : vector<2x1xf32> to vector<2x8xf32>
    %9 = arith.subf %5, %8 : vector<2x8xf32>
    %10 = math.exp %9 : vector<2x8xf32>
    %cst_5 = arith.constant dense<0.000000e+00> : vector<2xf32>
    %11 = vector.multi_reduction <add>, %10, %cst_5 [1] : vector<2x8xf32> to vector<2xf32>
    %12 = vector.shape_cast %11 : vector<2xf32> to vector<2x1xf32>
    %13 = vector.shape_cast %10 : vector<2x8xf32> to vector<2x8x1xf32>
    %14 = vector.broadcast %13 : vector<2x8x1xf32> to vector<2x8x32xf32>
    %15 = arith.mulf %0, %14 : vector<2x8x32xf32>
    %cst_6 = arith.constant dense<0.000000e+00> : vector<2x32xf32>
    %16 = vector.multi_reduction <add>, %15, %cst_6 [1] : vector<2x8x32xf32> to vector<2x32xf32>
    %17 = tpu.reciprocal %12 {approx = true} : vector<2x1xf32> -> vector<2x1xf32>
    %18 = vector.broadcast %17 : vector<2x1xf32> to vector<2x32xf32>
    %19 = arith.mulf %16, %18 : vector<2x32xf32>
    %c0_7 = arith.constant 0 : index
    %c0_8 = arith.constant 0 : index
    %20 = vector.load %arg3[%c0_7, %c0_8] : memref<2x32xf32, #tpu.memory_space<vmem>>, vector<2x32xf32>
    tpu.vector_store %arg3[%c0_7, %c0_8], %19 {strides = array<i32>} : memref<2x32xf32, #tpu.memory_space<vmem>>, vector<2x32xf32>,
    return
  }
  func.func @transform_0(%arg0: i32) -> (i32, i32, i32) {
    %c0_i32 = arith.constant 0 : i32
    %c0_i32_0 = arith.constant 0 : i32
    %c0_i32_1 = arith.constant 0 : i32
    return %arg0, %c0_i32, %c0_i32_0 : i32, i32, i32
  }
  func.func @transform_1(%arg0: i32) -> (i32, i32) {
    %c0_i32 = arith.constant 0 : i32
    %c0_i32_0 = arith.constant 0 : i32
    %c0_i32_1 = arith.constant 0 : i32
    return %c0_i32, %c0_i32_0 : i32, i32
  }
  func.func @transform_2(%arg0: i32) -> (i32, i32) {
    %c0_i32 = arith.constant 0 : i32
    %c0_i32_0 = arith.constant 0 : i32
    return %arg0, %c0_i32 : i32, i32
  }
}

</mosaic_0001>

<llo_original>
// kernel: self_attention_pooling.1
$region0: #{self_attention_pooling.1}
  #allocation0 [shape = 'u32[]', space=smem, size = 0x4, offset = 0x4, fixed_abs, tag = 'smem constant byte address 0x4 - core index']
  #allocation1 [shape = 'u32[144,128]{1,0:T(1,128)}', space=vmem, size = 0x12000, scoped, tag = 'internal scratch']
  %s0 = inlined_call_operand.hbm [shape: f32[2,8,32], index: 0, kind: input, shape index: {}]
  %s1 = inlined_call_operand.vmem [shape: f32[1,32], index: 1, kind: input, shape index: {}]
  %s2 = inlined_call_operand.hbm [shape: f32[2,32], index: 2, kind: output, shape index: {}]
  %s3 = sld [smem:[#allocation0]]
  $region22: #{self_attention_pooling.1} parent=0
    _
  %s5 = ssub.s32 1, %s3
  %s6 = scalar_select 0, %s5, %s3
  $region1: #{self_attention_pooling.1} parent=0
    #allocation2 [shape = 'u8[8192]{0}', space=vmem, size = 0x2000, scoped, tag = 'input window, operand 0, single buffered']
    #allocation3 [shape = 's32[1]{0}', space=sflag, size = 0x4, scoped, tag = 'scoped memory for self_attention_pooling.1']
    #allocation4 [shape = 's32[1]{0}', space=sflag, size = 0x4, scoped, tag = 'scoped memory for self_attention_pooling.1']
    #allocation5 [shape = 'u8[1024]{0}', space=vmem, size = 0x400, scoped, tag = 'output window, operand 0, single buffered']
    %7 = vsyncpa [#allocation3], 0
    %8 = vsyncpa [#allocation4], 0
    // Predicated region
    $region2: #{self_attention_pooling.1} parent=1 // pred_check
      _
    $region3: #{self_attention_pooling.1} parent=1 // pred_check_branch
      %10 = sbr.rel (0) target = $region5
    $region4: #{self_attention_pooling.1} parent=1 // pred_region
      %s12 = ssub.s32 256, 256
      %13 = vsyncadd [#allocation3], %s12
      %s14 = sshll.u32 [#allocation2], 4
      %s15 = int_to_ptr.vmem [resolvable:$true] %s14
      %20 = dma.hbm_to_vmem [thread:$0]  %s0, 256, %s15, [#allocation3], 128, 128, 8
    $region5: #{self_attention_pooling.1} parent=1 // pred_fallthru
      _
    // Predicated region
    $region6: #{self_attention_pooling.1} parent=1 // pred_check
      _
    $region7: #{self_attention_pooling.1} parent=1 // pred_check_branch
      %22 = sbr.rel (0) target = $region9
    $region8: #{self_attention_pooling.1} parent=1 // pred_region
      _
    $region9: #{self_attention_pooling.1} parent=1 // pred_fallthru
      _
    // Predicated region
    $region10: #{self_attention_pooling.1} parent=1 // pred_check
      _
    $region11: #{self_attention_pooling.1} parent=1 // pred_check_branch
      %24 = sbr.rel (0) target = $region13
    $region12: #{self_attention_pooling.1} parent=1 // pred_region
      %25 = dma.done [#allocation3], 256
    $region13: #{self_attention_pooling.1} parent=1 // pred_fallthru
      _
    %v26 = vld [vmem:[#allocation2] sm:$0xff]
    %v27 = vld [vmem:[#allocation2 + $0x8] sm:$0xff]
    %v28 = vld [vmem:[%s1] sm:$0x1]
    %v30 = vlaneseq
    %v31 = vshrl.u32 %v30, 7
    %v32 = vsub.s32 0, %v31
    %v33 = vrot.slane %v28, %v32
    %v35 = vmul.f32 %v26, %v33
    %v36 = vmul.f32 %v27, %v33
    %vm37 = vcmask 261120
    %v38 = vsel %vm37, %v35, 0.0
    %39 = vadd.xlane.f32.xlu0 %v38
    %v40 = vpop.xlane.xlu0 %39
    %v41 = vsel %vm37, %v36, 0.0
    %42 = vadd.xlane.f32.xlu0 %v41
    %v43 = vpop.xlane.xlu0 %42
    %v46 = vlaneseq
    %v47 = vand.u32 %v46, 127
    %v48 = vlaneseq
    %v49 = vshrl.u32 %v48, 7
    %v50 = vsub.s32 %v47, %v49
    %v51 = vrot.slane %v40, %v50
    %v52 = vlaneseq
    %v53 = vshrl.u32 %v52, 7
    %v54 = vsub.s32 %v47, %v53
    %v55 = vrot.slane %v43, %v54
    %vm56 = vcmask 1041409
    %v57 = vsel %vm56, %v55, %v51
    %vm59 = vcmask 58368
    %v60 = vsel %vm59, %v57, -inf
    %61 = vmax.xlane.f32.xlu0 %v60
    %v62 = vpop.xlane.xlu0 %61
    %v64 = vlaneseq
    %v65 = vshrl.u32 %v64, 7
    %v66 = vsub.s32 0, %v65
    %v67 = vrot.slane %v62, %v66
    %v68 = vlaneseq
    %v69 = vshrl.u32 %v68, 7
    %v70 = vsub.s32 1, %v69
    %v71 = vrot.slane %v62, %v70
    %v74 = vsub.f32 %v40, %v67
    %v75 = vsub.f32 %v43, %v71
    %v76 = vmul.f32 %v74, 1.442695
    %v77 = vpow.pop %v76
    %v78 = vmul.f32 %v75, 1.442695
    %v79 = vpow.pop %v78
    %82 = vset.pattern.permute.xlu0 0
    %83 = vperm.xlu0 %82, %v77
    %v84 = vpop.permute.xlu0 %83
    %85 = vset.pattern.permute.xlu0 0
    %86 = vperm.xlu0 %85, %v79
    %v87 = vpop.permute.xlu0 %86
    %v88 = vlaneseq
    %v89 = vshrl.u32 %v88, 7
    %v90 = vsub.s32 %v47, %v89
    %v91 = vrot.slane %v84, %v90
    %v92 = vlaneseq
    %v93 = vshrl.u32 %v92, 7
    %v94 = vsub.s32 %v47, %v93
    %v95 = vrot.slane %v87, %v94
    %v96 = vsel %vm56, %v95, %v91
    %v98 = vsel %vm59, %v96, 0.0
    %99 = vadd.xlane.f32.xlu0 %v98
    %v100 = vpop.xlane.xlu0 %99
    %v103 = vmul.f32 %v26, %v84
    %v104 = vmul.f32 %v27, %v87
    %v105 = vsel %vm37, %v103, 0.0
    %v106 = vrot.slane %v105, 4
    %v107 = vadd.f32 %v105, %v106
    %v108 = vrot.slane %v107, 2
    %v109 = vadd.f32 %v107, %v108
    %v110 = vrot.slane %v109, 1
    %v111 = vadd.f32 %v109, %v110
    %v112 = vsel %vm37, %v104, 0.0
    %v113 = vrot.slane %v112, 4
    %v114 = vadd.f32 %v112, %v113
    %v115 = vrot.slane %v114, 2
    %v116 = vadd.f32 %v114, %v115
    %v117 = vrot.slane %v116, 1
    %v118 = vadd.f32 %v116, %v117
    %v119 = vrcp.pop %v100
    %v121 = vrot.slane %v119, 1
    %v124 = vmul.f32 %v111, %v119
    %v125 = vmul.f32 %v118, %v121
    %v128 = vrot.slane %v125, 7
    %v129 = vsel %vm56, %v128, %v124
    %vm131 = vcmask 254976
    %132 = vst.msk [vmem:[#allocation5] sm:$0x3] %vm131, %v129
    // Predicated region
    $region14: #{self_attention_pooling.1} parent=1 // pred_check
      _
    $region15: #{self_attention_pooling.1} parent=1 // pred_check_branch
      %134 = sbr.rel (0) target = $region17
    $region16: #{self_attention_pooling.1} parent=1 // pred_region
      %s136 = ssub.s32 32, 32
      %137 = vsyncadd [#allocation4], %s136
      %s139 = sshll.u32 [#allocation5], 4
      %s140 = int_to_ptr.vmem [resolvable:$true] %s139
      %142 = dma.vmem_to_hbm [thread:$0]  %s140, 32, %s2, [#allocation4]
    $region17: #{self_attention_pooling.1} parent=1 // pred_fallthru
      _
    // Predicated region
    $region18: #{self_attention_pooling.1} parent=1 // pred_check
      _
    $region19: #{self_attention_pooling.1} parent=1 // pred_check_branch
      %144 = sbr.rel (0) target = $region21
    $region20: #{self_attention_pooling.1} parent=1 // pred_region
      %145 = dma.done [#allocation4], 32
    $region21: #{self_attention_pooling.1} parent=1 // pred_fallthru
      _
    %146 = vsyncpa [#allocation3], 1
    %147 = vsyncpa [#allocation4], 1

</llo_original>
